<compile_context>
chip_gen: v6e
topology: v6e:2x2x1
jax: 0.10.0
libtpu: 0.0.40
codegen_flags: <defaults>
</compile_context>

<pallas_src>
import numpy as np
import jax
import jax.numpy as jnp
from jax.experimental import pallas as pl
from jax.experimental.pallas import tpu as pltpu

LOG_2PI = float(np.log(2.0 * np.pi))

MAX_TS = 2048        # max sample-lanes per tile (intermediates ~0.4 KB/lane)
MAX_TB = 32          # max batch elements packed into one grid step
TARGET_LANES = 1024  # target rows of work per grid step (amortizes per-step overhead)


def _round_up(a, b):
    return (a + b - 1) // b * b


def vae_logprob_kernel(z_ref, x_ref, w1t_ref, b1_ref, w2t_ref, b2_ref,
                       w3t_ref, b3_ref, out_ref):
    # z_ref:   (TB, L, TS)  sample tile, samples on the 128-lane axis
    # x_ref:   (TB, 1, D)   data rows for the TB batch elements of this step
    # w*t_ref: (out, in)    pre-transposed weights;  b*_ref: (out, 1) bias columns
    # out_ref: (TB, 1, TS)  lane-dense per-sample log p(z) + log p(x|z)
    TB, L, _ = z_ref.shape
    D = x_ref.shape[-1]

    w1t = w1t_ref[...]
    b1 = b1_ref[...]
    w2t = w2t_ref[...]
    b2 = b2_ref[...]
    w3t = w3t_ref[...]
    b3 = b3_ref[...]
    ones_l = jnp.ones((1, L), jnp.float32)
    ones_d = jnp.ones((1, D), jnp.float32)
    log_p_z_const = -0.5 * L * LOG_2PI          # hoisted Gaussian normalization

    @pl.loop(0, TB)
    def _(b):
        z = z_ref[b]                             # (L, TS)
        x = x_ref[b]                             # (1, D)

        # log p(z) under N(0, I): latent-axis reduction as a ones-row matmul on the
        # MXU; result is already lane-dense (1, TS).
        zz = jnp.dot(ones_l, z * z, preferred_element_type=jnp.float32)
        log_p_z = log_p_z_const - 0.5 * zz

        # Generative MLP: Linear -> ReLU -> Linear -> ReLU -> Linear, all
        # intermediates (feature, TS); f32 accumulation on the MXU.
        h1 = jnp.maximum(jnp.dot(w1t, z, preferred_element_type=jnp.float32) + b1, 0.0)
        h2 = jnp.maximum(jnp.dot(w2t, h1, preferred_element_type=jnp.float32) + b2, 0.0)
        logits = jnp.dot(w3t, h2, preferred_element_type=jnp.float32) + b3        # (D, TS)

        # -BCEWithLogits(logits, x) summed over D, split so both reductions are
        # matmuls:  sum_d x_d*l_d  -  sum_d [max(l_d, 0) + log1p(exp(-|l_d|))]
        softplus = jnp.maximum(logits, 0.0) + jnp.log1p(jnp.exp(-jnp.abs(logits)))  # (D, TS)
        x_dot_l = jnp.dot(x, logits, preferred_element_type=jnp.float32)            # (1, TS)
        sp_sum = jnp.dot(ones_d, softplus, preferred_element_type=jnp.float32)      # (1, TS)

        out_ref[b] = log_p_z + x_dot_l - sp_sum   # (1, TS) lane-dense store


def init_params(key, latent_size, data_size):
    hidden = latent_size * 2
    ks = jax.random.split(key, 6)

    def lin(kw, kb, fan_in, fan_out):
        # torch nn.Linear-style init: uniform(-1/sqrt(fan_in), 1/sqrt(fan_in)), [in, out]
        bound = 1.0 / np.sqrt(fan_in)
        w = jax.random.uniform(kw, (fan_in, fan_out), jnp.float32, -bound, bound)
        b = jax.random.uniform(kb, (1, fan_out), jnp.float32, -bound, bound)
        return w, b

    w1, b1 = lin(ks[0], ks[1], latent_size, hidden)
    w2, b2 = lin(ks[2], ks[3], hidden, hidden)
    w3, b3 = lin(ks[4], ks[5], hidden, data_size)
    return (w1, b1, w2, b2, w3, b3)


def model_forward(z, x, params):
    """z: [B, S, L] f32, x: [B, D] f32 -> [B, S, 1] f32 (log p(z) + log p(x|z))."""
    B, S, L = z.shape
    D = x.shape[-1]
    w1, b1, w2, b2, w3, b3 = params
    H = w1.shape[-1]

    # Sample tiling: one tile up to MAX_TS lanes (no padding); otherwise a near-even
    # 128-aligned split with bounded zero padding (< 128 * n_tiles columns).
    if S <= MAX_TS:
        TS, n_s = S, 1
    else:
        n_s = pl.cdiv(S, MAX_TS)
        TS = _round_up(pl.cdiv(S, n_s), 128)
    S_pad = TS * n_s

    # Batch packing: TB batch elements per grid step (divides B so no partial batch
    # blocks), keeping >= 2 parallel grid steps when possible (v7x has 2 TCs).
    TB = max(1, min(B, MAX_TB, TARGET_LANES // max(TS, 1)))
    while B % TB:
        TB -= 1
    if (B // TB) * n_s == 1 and TB > 1:
        TB = max(1, TB // 2)
        while B % TB:
            TB -= 1
    nb = B // TB

    # Layout prep (one cheap pass over z): samples onto the lane axis, weights to
    # [out, in], biases to columns.  Padded z columns are zero -> finite outputs
    # that are sliced off below.
    z_t = jnp.transpose(z, (0, 2, 1))                      # (B, L, S)
    if S_pad != S:
        z_t = jnp.pad(z_t, ((0, 0), (0, 0), (0, S_pad - S)))
    x3 = x[:, None, :]                                     # (B, 1, D)
    w1t, w2t, w3t = w1.T, w2.T, w3.T                       # (H,L), (H,H), (D,H)
    b1c, b2c, b3c = b1.reshape(H, 1), b2.reshape(H, 1), b3.reshape(D, 1)

    rows = B * S_pad
    cost = pl.CostEstimate(
        flops=int(2 * rows * (L * H + H * H + H * D + L + 2 * D) + 8 * rows * D),
        transcendentals=int(2 * rows * D),                 # exp + log1p per logit
        bytes_accessed=int(4 * (z_t.size + x.size + rows
                                + sum(int(p.size) for p in params))))

    def resident(shape):   # weights / biases stay VMEM-resident across the grid
        return pl.BlockSpec(shape, lambda b, s: (0, 0))

    out = pl.pallas_call(
        vae_logprob_kernel,
        out_shape=jax.ShapeDtypeStruct((B, 1, S_pad), jnp.float32),
        grid=(nb, n_s),
        in_specs=[
            pl.BlockSpec((TB, L, TS), lambda b, s: (b, 0, s)),   # z sample tile
            pl.BlockSpec((TB, 1, D), lambda b, s: (b, 0, 0)),    # x rows (constant in s)
            resident((H, L)), resident((H, 1)),
            resident((H, H)), resident((H, 1)),
            resident((D, H)), resident((D, 1)),
        ],
        out_specs=pl.BlockSpec((TB, 1, TS), lambda b, s: (b, 0, s)),
        compiler_params=pltpu.CompilerParams(
            dimension_semantics=("parallel", "parallel")),
        cost_estimate=cost,
    )(z_t, x3, w1t, b1c, w2t, b2c, w3t, b3c)

    # (B, 1, S_pad) -> drop sample padding, restore torch-style trailing keepdim.
    return out[:, 0, :S, None]


def model_forward_ref(z, x, params):
    """Pure-JAX reference for validation."""
    w1, b1, w2, b2, w3, b3 = params
    log_p_z = jnp.sum(-0.5 * LOG_2PI - 0.5 * z * z, axis=-1, keepdims=True)
    h1 = jnp.maximum(z @ w1 + b1, 0.0)
    h2 = jnp.maximum(h1 @ w2 + b2, 0.0)
    logits = h2 @ w3 + b3
    xb = x[:, None, :]
    neg_bce = xb * logits - jnp.maximum(logits, 0.0) - jnp.log1p(jnp.exp(-jnp.abs(logits)))
    log_p_x = jnp.sum(neg_bce, axis=-1, keepdims=True)
    return log_p_z + log_p_x


if __name__ == "__main__":
    latent_size = 8
    data_size = 32
    batch = 2
    n_samples = 4

    key = jax.random.PRNGKey(0)
    kp, kz, kx = jax.random.split(key, 3)

    params = init_params(kp, latent_size, data_size)
    z = jax.random.normal(kz, (batch, n_samples, latent_size), dtype=jnp.float32)
    # Bernoulli-ish data in {0, 1}
    x = (jax.random.uniform(kx, (batch, data_size), dtype=jnp.float32) > 0.5).astype(jnp.float32)

    out = jax.block_until_ready(model_forward(z, x, params))
    ref = model_forward_ref(z, x, params)
    assert out.shape == (batch, n_samples, 1)
    np.testing.assert_allclose(np.asarray(out), np.asarray(ref), rtol=1e-5, atol=1e-4)

    # Larger sample count: one dense 640-lane tile per batch element (no padding).
    S2 = 640
    z2 = jax.random.normal(jax.random.PRNGKey(1), (batch, S2, latent_size), dtype=jnp.float32)
    out2 = jax.block_until_ready(model_forward(z2, x, params))
    ref2 = model_forward_ref(z2, x, params)
    assert out2.shape == (batch, S2, 1)
    np.testing.assert_allclose(np.asarray(out2), np.asarray(ref2), rtol=1e-5, atol=1e-4)

    # Larger batch with small S: exercises the TB>1 batch-packing (in-kernel loop).
    B3, S3 = 8, 48
    k3 = jax.random.split(jax.random.PRNGKey(2), 2)
    z3 = jax.random.normal(k3[0], (B3, S3, latent_size), dtype=jnp.float32)
    x3 = (jax.random.uniform(k3[1], (B3, data_size), dtype=jnp.float32) > 0.5).astype(jnp.float32)
    out3 = jax.block_until_ready(model_forward(z3, x3, params))
    ref3 = model_forward_ref(z3, x3, params)
    assert out3.shape == (B3, S3, 1)
    np.testing.assert_allclose(np.asarray(out3), np.asarray(ref3), rtol=1e-5, atol=1e-4)

    print("KERNEL_OK")
</pallas_src>

<mosaic_0001>
module attributes {stable_mosaic.version = 11 : i64} {
  func.func @vae_logprob_kernel(%arg0: i32, %arg1: i32, %arg2: memref<1x8x4xf32, #tpu.memory_space<vmem>>, %arg3: memref<1x1x32xf32, #tpu.memory_space<vmem>>, %arg4: memref<16x8xf32, #tpu.memory_space<vmem>>, %arg5: memref<16x1xf32, #tpu.memory_space<vmem>>, %arg6: memref<16x16xf32, #tpu.memory_space<vmem>>, %arg7: memref<16x1xf32, #tpu.memory_space<vmem>>, %arg8: memref<32x16xf32, #tpu.memory_space<vmem>>, %arg9: memref<32x1xf32, #tpu.memory_space<vmem>>, %arg10: memref<1x1x4xf32, #tpu.memory_space<vmem>>) attributes {dimension_semantics = [#tpu.dimension_semantics<parallel>, #tpu.dimension_semantics<parallel>], iteration_bounds = array<i64: 2, 1>, scalar_prefetch = 0 : i64, scratch_operands = 0 : i64, tpu.core_type = #tpu.core_type<tc>, window_params = [{transform_indices = @transform_0, window_bounds = array<i64: 1, 8, 4>}, {transform_indices = @transform_1, window_bounds = array<i64: 1, 1, 32>}, {pipeline_mode = #tpu.pipeline_mode<synchronous>, transform_indices = @transform_2, window_bounds = array<i64: 16, 8>}, {pipeline_mode = #tpu.pipeline_mode<synchronous>, transform_indices = @transform_3, window_bounds = array<i64: 16, 1>}, {pipeline_mode = #tpu.pipeline_mode<synchronous>, transform_indices = @transform_4, window_bounds = array<i64: 16, 16>}, {pipeline_mode = #tpu.pipeline_mode<synchronous>, transform_indices = @transform_5, window_bounds = array<i64: 16, 1>}, {pipeline_mode = #tpu.pipeline_mode<synchronous>, transform_indices = @transform_6, window_bounds = array<i64: 32, 16>}, {pipeline_mode = #tpu.pipeline_mode<synchronous>, transform_indices = @transform_7, window_bounds = array<i64: 32, 1>}, {transform_indices = @transform_8, window_bounds = array<i64: 1, 1, 4>}]} {
    %c0 = arith.constant 0 : index
    %c0_0 = arith.constant 0 : index
    %0 = vector.load %arg4[%c0, %c0_0] : memref<16x8xf32, #tpu.memory_space<vmem>>, vector<16x8xf32>
    %c0_1 = arith.constant 0 : index
    %c0_2 = arith.constant 0 : index
    %1 = vector.load %arg5[%c0_1, %c0_2] : memref<16x1xf32, #tpu.memory_space<vmem>>, vector<16x1xf32>
    %c0_3 = arith.constant 0 : index
    %c0_4 = arith.constant 0 : index
    %2 = vector.load %arg6[%c0_3, %c0_4] : memref<16x16xf32, #tpu.memory_space<vmem>>, vector<16x16xf32>
    %c0_5 = arith.constant 0 : index
    %c0_6 = arith.constant 0 : index
    %3 = vector.load %arg7[%c0_5, %c0_6] : memref<16x1xf32, #tpu.memory_space<vmem>>, vector<16x1xf32>
    %c0_7 = arith.constant 0 : index
    %c0_8 = arith.constant 0 : index
    %4 = vector.load %arg8[%c0_7, %c0_8] : memref<32x16xf32, #tpu.memory_space<vmem>>, vector<32x16xf32>
    %c0_9 = arith.constant 0 : index
    %c0_10 = arith.constant 0 : index
    %5 = vector.load %arg9[%c0_9, %c0_10] : memref<32x1xf32, #tpu.memory_space<vmem>>, vector<32x1xf32>
    %cst = arith.constant 1.000000e+00 : f32
    %6 = vector.broadcast %cst : f32 to vector<1x8xf32>
    %cst_11 = arith.constant 1.000000e+00 : f32
    %7 = vector.broadcast %cst_11 : f32 to vector<1x32xf32>
    %c0_i32 = arith.constant 0 : i32
    %c1_i32 = arith.constant 1 : i32
    %8 = arith.muli %c0_i32, %c1_i32 : i32
    %c0_i32_12 = arith.constant 0 : i32
    %9 = arith.addi %c0_i32_12, %8 : i32
    %10 = arith.index_cast %9 : i32 to index
    %c0_13 = arith.constant 0 : index
    %c0_14 = arith.constant 0 : index
    %11 = vector.load %arg2[%10, %c0_13, %c0_14] : memref<1x8x4xf32, #tpu.memory_space<vmem>>, vector<1x8x4xf32>
    %12 = vector.shape_cast %11 : vector<1x8x4xf32> to vector<8x4xf32>
    %13 = arith.index_cast %9 : i32 to index
    %c0_15 = arith.constant 0 : index
    %c0_16 = arith.constant 0 : index
    %14 = vector.load %arg3[%13, %c0_15, %c0_16] : memref<1x1x32xf32, #tpu.memory_space<vmem>>, vector<1x1x32xf32>
    %15 = vector.shape_cast %14 : vector<1x1x32xf32> to vector<1x32xf32>
    %16 = arith.mulf %12, %12 : vector<8x4xf32>
    %cst_17 = arith.constant dense<0.000000e+00> : vector<1x4xf32>
    %17 = tpu.matmul %6, %16, %cst_17 {dimension_numbers = #tpu.dot_dimension_numbers<[1], [0], [0], [1], [0, 0, 1, 1], [], []>} : vector<1x8xf32>, vector<8x4xf32>, vector<1x4xf32> -> vector<1x4xf32>
    %cst_18 = arith.constant 5.000000e-01 : f32
    %18 = vector.broadcast %cst_18 : f32 to vector<1x4xf32>
    %19 = arith.mulf %18, %17 : vector<1x4xf32>
    %cst_19 = arith.constant -7.35150814 : f32
    %20 = vector.broadcast %cst_19 : f32 to vector<1x4xf32>
    %21 = arith.subf %20, %19 : vector<1x4xf32>
    %cst_20 = arith.constant dense<0.000000e+00> : vector<16x4xf32>
    %22 = tpu.matmul %0, %12, %cst_20 {dimension_numbers = #tpu.dot_dimension_numbers<[1], [0], [0], [1], [0, 0, 1, 1], [], []>} : vector<16x8xf32>, vector<8x4xf32>, vector<16x4xf32> -> vector<16x4xf32>
    %23 = vector.broadcast %1 : vector<16x1xf32> to vector<16x4xf32>
    %24 = arith.addf %22, %23 : vector<16x4xf32>
    %cst_21 = arith.constant 0.000000e+00 : f32
    %25 = vector.broadcast %cst_21 : f32 to vector<16x4xf32>
    %26 = arith.maximumf %24, %25 : vector<16x4xf32>
    %cst_22 = arith.constant dense<0.000000e+00> : vector<16x4xf32>
    %27 = tpu.matmul %2, %26, %cst_22 {dimension_numbers = #tpu.dot_dimension_numbers<[1], [0], [0], [1], [0, 0, 1, 1], [], []>} : vector<16x16xf32>, vector<16x4xf32>, vector<16x4xf32> -> vector<16x4xf32>
    %28 = vector.broadcast %3 : vector<16x1xf32> to vector<16x4xf32>
    %29 = arith.addf %27, %28 : vector<16x4xf32>
    %cst_23 = arith.constant 0.000000e+00 : f32
    %30 = vector.broadcast %cst_23 : f32 to vector<16x4xf32>
    %31 = arith.maximumf %29, %30 : vector<16x4xf32>
    %cst_24 = arith.constant dense<0.000000e+00> : vector<32x4xf32>
    %32 = tpu.matmul %4, %31, %cst_24 {dimension_numbers = #tpu.dot_dimension_numbers<[1], [0], [0], [1], [0, 0, 1, 1], [], []>} : vector<32x16xf32>, vector<16x4xf32>, vector<32x4xf32> -> vector<32x4xf32>
    %33 = vector.broadcast %5 : vector<32x1xf32> to vector<32x4xf32>
    %34 = arith.addf %32, %33 : vector<32x4xf32>
    %cst_25 = arith.constant 0.000000e+00 : f32
    %35 = vector.broadcast %cst_25 : f32 to vector<32x4xf32>
    %36 = arith.maximumf %34, %35 : vector<32x4xf32>
    %37 = math.absf %34 : vector<32x4xf32>
    %cst_26 = arith.constant 0.000000e+00 : f32
    %38 = vector.broadcast %cst_26 : f32 to vector<32x4xf32>
    %39 = arith.subf %38, %37 : vector<32x4xf32>
    %40 = math.exp %39 : vector<32x4xf32>
    %41 = math.log1p %40 : vector<32x4xf32>
    %42 = arith.addf %36, %41 : vector<32x4xf32>
    %cst_27 = arith.constant dense<0.000000e+00> : vector<1x4xf32>
    %43 = tpu.matmul %15, %34, %cst_27 {dimension_numbers = #tpu.dot_dimension_numbers<[1], [0], [0], [1], [0, 0, 1, 1], [], []>} : vector<1x32xf32>, vector<32x4xf32>, vector<1x4xf32> -> vector<1x4xf32>
    %cst_28 = arith.constant dense<0.000000e+00> : vector<1x4xf32>
    %44 = tpu.matmul %7, %42, %cst_28 {dimension_numbers = #tpu.dot_dimension_numbers<[1], [0], [0], [1], [0, 0, 1, 1], [], []>} : vector<1x32xf32>, vector<32x4xf32>, vector<1x4xf32> -> vector<1x4xf32>
    %45 = arith.addf %21, %43 : vector<1x4xf32>
    %46 = arith.subf %45, %44 : vector<1x4xf32>
    %47 = arith.index_cast %9 : i32 to index
    %c0_29 = arith.constant 0 : index
    %c0_30 = arith.constant 0 : index
    %48 = vector.load %arg10[%47, %c0_29, %c0_30] : memref<1x1x4xf32, #tpu.memory_space<vmem>>, vector<1x1x4xf32>
    %49 = vector.shape_cast %48 : vector<1x1x4xf32> to vector<1x4xf32>
    %50 = vector.shape_cast %46 : vector<1x4xf32> to vector<1x1x4xf32>
    tpu.vector_store %arg10[%47, %c0_29, %c0_30], %50 {strides = array<i32>} : memref<1x1x4xf32, #tpu.memory_space<vmem>>, vector<1x1x4xf32>,
    %c1_i32_31 = arith.constant 1 : i32
    return
  }
  func.func @transform_0(%arg0: i32, %arg1: i32) -> (i32, i32, i32) {
    %c0_i32 = arith.constant 0 : i32
    %c0_i32_0 = arith.constant 0 : i32
    return %arg0, %c0_i32, %arg1 : i32, i32, i32
  }
  func.func @transform_1(%arg0: i32, %arg1: i32) -> (i32, i32, i32) {
    %c0_i32 = arith.constant 0 : i32
    %c0_i32_0 = arith.constant 0 : i32
    %c0_i32_1 = arith.constant 0 : i32
    return %arg0, %c0_i32, %c0_i32_0 : i32, i32, i32
  }
  func.func @transform_2(%arg0: i32, %arg1: i32) -> (i32, i32) {
    %c0_i32 = arith.constant 0 : i32
    %c0_i32_0 = arith.constant 0 : i32
    %c0_i32_1 = arith.constant 0 : i32
    return %c0_i32, %c0_i32_0 : i32, i32
  }
  func.func @transform_3(%arg0: i32, %arg1: i32) -> (i32, i32) {
    %c0_i32 = arith.constant 0 : i32
    %c0_i32_0 = arith.constant 0 : i32
    %c0_i32_1 = arith.constant 0 : i32
    return %c0_i32, %c0_i32_0 : i32, i32
  }
  func.func @transform_4(%arg0: i32, %arg1: i32) -> (i32, i32) {
    %c0_i32 = arith.constant 0 : i32
    %c0_i32_0 = arith.constant 0 : i32
    %c0_i32_1 = arith.constant 0 : i32
    return %c0_i32, %c0_i32_0 : i32, i32
  }
  func.func @transform_5(%arg0: i32, %arg1: i32) -> (i32, i32) {
    %c0_i32 = arith.constant 0 : i32
    %c0_i32_0 = arith.constant 0 : i32
    %c0_i32_1 = arith.constant 0 : i32
    return %c0_i32, %c0_i32_0 : i32, i32
  }
  func.func @transform_6(%arg0: i32, %arg1: i32) -> (i32, i32) {
    %c0_i32 = arith.constant 0 : i32
    %c0_i32_0 = arith.constant 0 : i32
    %c0_i32_1 = arith.constant 0 : i32
    return %c0_i32, %c0_i32_0 : i32, i32
  }
  func.func @transform_7(%arg0: i32, %arg1: i32) -> (i32, i32) {
    %c0_i32 = arith.constant 0 : i32
    %c0_i32_0 = arith.constant 0 : i32
    %c0_i32_1 = arith.constant 0 : i32
    return %c0_i32, %c0_i32_0 : i32, i32
  }
  func.func @transform_8(%arg0: i32, %arg1: i32) -> (i32, i32, i32) {
    %c0_i32 = arith.constant 0 : i32
    %c0_i32_0 = arith.constant 0 : i32
    return %arg0, %c0_i32, %arg1 : i32, i32, i32
  }
}

</mosaic_0001>

<llo_original>
// kernel: tpu_custom_call.1
$region0: #{tpu_custom_call.1}
  #allocation0 [shape = 'u32[]', space=smem, size = 0x4, offset = 0x4, fixed_abs, tag = 'smem constant byte address 0x4 - core index']
  #allocation1 [shape = 'u32[144,128]{1,0:T(1,128)}', space=vmem, size = 0x12000, scoped, tag = 'internal scratch']
  %s0 = inlined_call_operand.vmem [shape: f32[2,8,4], index: 0, kind: input, shape index: {}]
  %s1 = inlined_call_operand.vmem [shape: f32[2,1,32], index: 1, kind: input, shape index: {}]
  %s2 = inlined_call_operand.vmem [shape: f32[16,8], index: 2, kind: input, shape index: {}]
  %s3 = inlined_call_operand.vmem [shape: f32[16,1], index: 3, kind: input, shape index: {}]
  %s4 = inlined_call_operand.vmem [shape: f32[16,16], index: 4, kind: input, shape index: {}]
  %s5 = inlined_call_operand.vmem [shape: f32[16,1], index: 5, kind: input, shape index: {}]
  %s6 = inlined_call_operand.vmem [shape: f32[32,16], index: 6, kind: input, shape index: {}]
  %s7 = inlined_call_operand.vmem [shape: f32[32,1], index: 7, kind: input, shape index: {}]
  %s8 = inlined_call_operand.hbm [shape: f32[2,1,4], index: 8, kind: output, shape index: {}]
  %s9 = sld [smem:[#allocation0]]
  $region65: #{tpu_custom_call.1} parent=0
    _
  %s11 = ssub.s32 1, %s9
  %s12 = scalar_select 0, %s11, %s9
  $region1: #{tpu_custom_call.1} parent=0
    #allocation2 [shape = 'u8[1024]{0}', space=vmem, size = 0x400, scoped, tag = 'output window, operand 0']
    #allocation3 [shape = 's32[2]{0}', space=sflag, size = 0x8, scoped, tag = 'scoped memory for tpu_custom_call.1']
    %13 = vsyncpa [#allocation3], 0
    %s14 = scalar_lea.sflag [#allocation3], 1
    %15 = vsyncpa %s14, 0
    loop: start=0, step=1, limit=4
    $region2: #{tpu_custom_call.1} parent=1 // loop_pre_header
      _
    $region3: #{tpu_custom_call.1} parent=1 // loop_header
      %s17 = sphi 0, %s21
      %p18 = scmp.ge.s32.totalorder %s17, 4
      %s24 = sphi 0, %s36
      %s25 = sphi 0, %s32
      %s26 = sphi 0, %s24
      %s27 = sphi 0, %s25
      %s28 = sphi 0, %s26
      %s29 = sphi 0, %s27
      %s41 = sphi 0, %s43
      %s44 = sphi 0, %s41
      %s45 = sphi 0, %s44
      %s61 = sphi 0, %s45
      %s67 = sphi 0, %s69
      %s70 = sphi 0, %s67
      %s71 = sphi 0, %s70
      %s87 = sphi 0, %s71
      %s91 = sphi 0, %s91
      %s93 = sphi 0, %s91
      %s94 = sphi 0, %s93
      %s108 = sphi 0, %s94
      %s112 = sphi 0, %s112
      %s114 = sphi 0, %s112
      %s115 = sphi 0, %s114
      %s129 = sphi 0, %s115
      %s133 = sphi 0, %s133
      %s135 = sphi 0, %s133
      %s136 = sphi 0, %s135
      %s150 = sphi 0, %s136
      %s154 = sphi 0, %s154
      %s156 = sphi 0, %s154
      %s157 = sphi 0, %s156
      %s171 = sphi 0, %s157
      %s175 = sphi 0, %s175
      %s177 = sphi 0, %s175
      %s178 = sphi 0, %s177
      %s192 = sphi 0, %s178
      %s196 = sphi 0, %s196
      %s198 = sphi 0, %s196
      %s199 = sphi 0, %s198
      %s213 = sphi 0, %s199
      %s221 = sphi 0, %s223
      %s224 = sphi 0, %s221
      %s225 = sphi 0, %s224
      %s241 = sphi 0, %s225
    $region4: #{tpu_custom_call.1} parent=1 // loop_header_branch
      %20 = sbr.rel (%p18) target = $region8
    $region5: #{tpu_custom_call.1} parent=1 // loop_body
      %s22 = ssub.s32 %s17, 1
      %s23 = ssub.s32 %s17, 2
      %s30 = sadd.s32 1, %s25
      %p31 = scmp.ge.s32.totalorder %s30, 1
      %s32 = scalar_select %p31, 0, %s30
      %s33 = sadd.s32 1, %s24
      %s34 = scalar_select %p31, %s33, %s24
      %p35 = scmp.ge.s32.totalorder %s34, 2
      %s36 = scalar_select %p35, 0, %s34
      %s37 = ssub.s32 %s24, %s36
      %s38 = ssub.s32 %s25, %s32
      %s39 = sor.u32 %s37, %s38
      %p40 = scmp.eq.s32.totalorder %s39, 0
      %s42 = sadd.s32 %s41, 1
      %s43 = scalar_select %p40, %s41, %s42
      %p46 = pneg %p40
      %p47 = scmp.eq.s32.totalorder %s17, 1
      %p48 = por %p46, %p47
      %p49 = scmp.ne.s32.totalorder %s41, %s44
      %p50 = scmp.eq.s32.totalorder %s17, 0
      %p51 = por %p49, %p50
      %p52 = scmp.ne.s32.totalorder %s41, %s44
      %p53 = scmp.eq.s32.totalorder %s22, 1
      %p54 = por %p52, %p53
      %p55 = scmp.ne.s32.totalorder %s44, %s45
      %p56 = scmp.eq.s32.totalorder %s22, 0
      %p57 = por %p55, %p56
      %p58 = scmp.ne.s32.totalorder %s44, %s45
      %p59 = scmp.eq.s32.totalorder %s23, 1
      %p60 = por %p58, %p59
      %p62 = scmp.ne.s32.totalorder %s45, %s61
      %p63 = scmp.eq.s32.totalorder %s23, 0
      %p64 = por %p62, %p63
      %s65 = ssub.s32 %s24, %s36
      %p66 = scmp.eq.s32.totalorder %s65, 0
      %s68 = sadd.s32 %s67, 1
      %s69 = scalar_select %p66, %s67, %s68
      %p72 = pneg %p66
      %p73 = scmp.eq.s32.totalorder %s17, 1
      %p74 = por %p72, %p73
      %p75 = scmp.ne.s32.totalorder %s67, %s70
      %p76 = scmp.eq.s32.totalorder %s17, 0
      %p77 = por %p75, %p76
      %p78 = scmp.ne.s32.totalorder %s67, %s70
      %p79 = scmp.eq.s32.totalorder %s22, 1
      %p80 = por %p78, %p79
      %p81 = scmp.ne.s32.totalorder %s70, %s71
      %p82 = scmp.eq.s32.totalorder %s22, 0
      %p83 = por %p81, %p82
      %p84 = scmp.ne.s32.totalorder %s70, %s71
      %p85 = scmp.eq.s32.totalorder %s23, 1
      %p86 = por %p84, %p85
      %p88 = scmp.ne.s32.totalorder %s71, %s87
      %p89 = scmp.eq.s32.totalorder %s23, 0
      %p90 = por %p88, %p89
      %s92 = sadd.s32 %s91, 1
      %p95 = scmp.eq.s32.totalorder %s17, 1
      %p96 = scmp.ne.s32.totalorder %s91, %s93
      %p97 = scmp.eq.s32.totalorder %s17, 0
      %p98 = por %p96, %p97
      %p99 = scmp.ne.s32.totalorder %s91, %s93
      %p100 = scmp.eq.s32.totalorder %s22, 1
      %p101 = por %p99, %p100
      %p102 = scmp.ne.s32.totalorder %s93, %s94
      %p103 = scmp.eq.s32.totalorder %s22, 0
      %p104 = por %p102, %p103
      %p105 = scmp.ne.s32.totalorder %s93, %s94
      %p106 = scmp.eq.s32.totalorder %s23, 1
      %p107 = por %p105, %p106
      %p109 = scmp.ne.s32.totalorder %s94, %s108
      %p110 = scmp.eq.s32.totalorder %s23, 0
      %p111 = por %p109, %p110
      %s113 = sadd.s32 %s112, 1
      %p116 = scmp.eq.s32.totalorder %s17, 1
      %p117 = scmp.ne.s32.totalorder %s112, %s114
      %p118 = scmp.eq.s32.totalorder %s17, 0
      %p119 = por %p117, %p118
      %p120 = scmp.ne.s32.totalorder %s112, %s114
      %p121 = scmp.eq.s32.totalorder %s22, 1
      %p122 = por %p120, %p121
      %p123 = scmp.ne.s32.totalorder %s114, %s115
      %p124 = scmp.eq.s32.totalorder %s22, 0
      %p125 = por %p123, %p124
      %p126 = scmp.ne.s32.totalorder %s114, %s115
      %p127 = scmp.eq.s32.totalorder %s23, 1
      %p128 = por %p126, %p127
      %p130 = scmp.ne.s32.totalorder %s115, %s129
      %p131 = scmp.eq.s32.totalorder %s23, 0
      %p132 = por %p130, %p131
      %s134 = sadd.s32 %s133, 1
      %p137 = scmp.eq.s32.totalorder %s17, 1
      %p138 = scmp.ne.s32.totalorder %s133, %s135
      %p139 = scmp.eq.s32.totalorder %s17, 0
      %p140 = por %p138, %p139
      %p141 = scmp.ne.s32.totalorder %s133, %s135
      %p142 = scmp.eq.s32.totalorder %s22, 1
      %p143 = por %p141, %p142
      %p144 = scmp.ne.s32.totalorder %s135, %s136
      %p145 = scmp.eq.s32.totalorder %s22, 0
      %p146 = por %p144, %p145
      %p147 = scmp.ne.s32.totalorder %s135, %s136
      %p148 = scmp.eq.s32.totalorder %s23, 1
      %p149 = por %p147, %p148
      %p151 = scmp.ne.s32.totalorder %s136, %s150
      %p152 = scmp.eq.s32.totalorder %s23, 0
      %p153 = por %p151, %p152
      %s155 = sadd.s32 %s154, 1
      %p158 = scmp.eq.s32.totalorder %s17, 1
      %p159 = scmp.ne.s32.totalorder %s154, %s156
      %p160 = scmp.eq.s32.totalorder %s17, 0
      %p161 = por %p159, %p160
      %p162 = scmp.ne.s32.totalorder %s154, %s156
      %p163 = scmp.eq.s32.totalorder %s22, 1
      %p164 = por %p162, %p163
      %p165 = scmp.ne.s32.totalorder %s156, %s157
      %p166 = scmp.eq.s32.totalorder %s22, 0
      %p167 = por %p165, %p166
      %p168 = scmp.ne.s32.totalorder %s156, %s157
      %p169 = scmp.eq.s32.totalorder %s23, 1
      %p170 = por %p168, %p169
      %p172 = scmp.ne.s32.totalorder %s157, %s171
      %p173 = scmp.eq.s32.totalorder %s23, 0
      %p174 = por %p172, %p173
      %s176 = sadd.s32 %s175, 1
      %p179 = scmp.eq.s32.totalorder %s17, 1
      %p180 = scmp.ne.s32.totalorder %s175, %s177
      %p181 = scmp.eq.s32.totalorder %s17, 0
      %p182 = por %p180, %p181
      %p183 = scmp.ne.s32.totalorder %s175, %s177
      %p184 = scmp.eq.s32.totalorder %s22, 1
      %p185 = por %p183, %p184
      %p186 = scmp.ne.s32.totalorder %s177, %s178
      %p187 = scmp.eq.s32.totalorder %s22, 0
      %p188 = por %p186, %p187
      %p189 = scmp.ne.s32.totalorder %s177, %s178
      %p190 = scmp.eq.s32.totalorder %s23, 1
      %p191 = por %p189, %p190
      %p193 = scmp.ne.s32.totalorder %s178, %s192
      %p194 = scmp.eq.s32.totalorder %s23, 0
      %p195 = por %p193, %p194
      %s197 = sadd.s32 %s196, 1
      %p200 = scmp.eq.s32.totalorder %s17, 1
      %p201 = scmp.ne.s32.totalorder %s196, %s198
      %p202 = scmp.eq.s32.totalorder %s17, 0
      %p203 = por %p201, %p202
      %p204 = scmp.ne.s32.totalorder %s196, %s198
      %p205 = scmp.eq.s32.totalorder %s22, 1
      %p206 = por %p204, %p205
      %p207 = scmp.ne.s32.totalorder %s198, %s199
      %p208 = scmp.eq.s32.totalorder %s22, 0
      %p209 = por %p207, %p208
      %p210 = scmp.ne.s32.totalorder %s198, %s199
      %p211 = scmp.eq.s32.totalorder %s23, 1
      %p212 = por %p210, %p211
      %p214 = scmp.ne.s32.totalorder %s199, %s213
      %p215 = scmp.eq.s32.totalorder %s23, 0
      %p216 = por %p214, %p215
      %s217 = ssub.s32 %s24, %s36
      %s218 = ssub.s32 %s25, %s32
      %s219 = sor.u32 %s217, %s218
      %p220 = scmp.eq.s32.totalorder %s219, 0
      %s222 = sadd.s32 %s221, 1
      %s223 = scalar_select %p220, %s221, %s222
      %p226 = pneg %p220
      %p227 = scmp.eq.s32.totalorder %s17, 1
      %p228 = por %p226, %p227
      %p229 = scmp.ne.s32.totalorder %s221, %s224
      %p230 = scmp.eq.s32.totalorder %s17, 0
      %p231 = por %p229, %p230
      %p232 = scmp.ne.s32.totalorder %s221, %s224
      %p233 = scmp.eq.s32.totalorder %s22, 1
      %p234 = por %p232, %p233
      %p235 = scmp.ne.s32.totalorder %s224, %s225
      %p236 = scmp.eq.s32.totalorder %s22, 0
      %p237 = por %p235, %p236
      %p238 = scmp.ne.s32.totalorder %s224, %s225
      %p239 = scmp.eq.s32.totalorder %s23, 1
      %p240 = por %p238, %p239
      %p242 = scmp.ne.s32.totalorder %s225, %s241
      %p243 = scmp.eq.s32.totalorder %s23, 0
      %p244 = por %p242, %p243
      %p245 = scmp.le.s32.totalorder 1, %s17
      %p246 = scmp.lt.s32.totalorder %s17, 3
      %p247 = pnand %p245, %p246
      %p248 = pneg %p247
      // Predicated region
      $region9: #{tpu_custom_call.1} parent=5 // pred_check
        _
      $region10: #{tpu_custom_call.1} parent=5 // pred_check_branch
        %250 = sbr.rel (%p247) target = $region12
      $region11: #{tpu_custom_call.1} parent=5 // pred_region
        %s251 = ssub.s32 %s17, 1
        // Predicated region
        $region13: #{tpu_custom_call.1} parent=11 // pred_check
          %p252 = pneg %p104
        $region14: #{tpu_custom_call.1} parent=11 // pred_check_branch
          %254 = sbr.rel (%p252) target = $region16
        $region15: #{tpu_custom_call.1} parent=11 // pred_region
          _
        $region16: #{tpu_custom_call.1} parent=11 // pred_fallthru
          _
        // Predicated region
        $region17: #{tpu_custom_call.1} parent=11 // pred_check
          %p255 = pneg %p125
        $region18: #{tpu_custom_call.1} parent=11 // pred_check_branch
          %257 = sbr.rel (%p255) target = $region20
        $region19: #{tpu_custom_call.1} parent=11 // pred_region
          _
        $region20: #{tpu_custom_call.1} parent=11 // pred_fallthru
          _
        // Predicated region
        $region21: #{tpu_custom_call.1} parent=11 // pred_check
          %p258 = pneg %p146
        $region22: #{tpu_custom_call.1} parent=11 // pred_check_branch
          %260 = sbr.rel (%p258) target = $region24
        $region23: #{tpu_custom_call.1} parent=11 // pred_region
          _
        $region24: #{tpu_custom_call.1} parent=11 // pred_fallthru
          _
        // Predicated region
        $region25: #{tpu_custom_call.1} parent=11 // pred_check
          %p261 = pneg %p167
        $region26: #{tpu_custom_call.1} parent=11 // pred_check_branch
          %263 = sbr.rel (%p261) target = $region28
        $region27: #{tpu_custom_call.1} parent=11 // pred_region
          _
        $region28: #{tpu_custom_call.1} parent=11 // pred_fallthru
          _
        // Predicated region
        $region29: #{tpu_custom_call.1} parent=11 // pred_check
          %p264 = pneg %p188
        $region30: #{tpu_custom_call.1} parent=11 // pred_check_branch
          %266 = sbr.rel (%p264) target = $region32
        $region31: #{tpu_custom_call.1} parent=11 // pred_region
          _
        $region32: #{tpu_custom_call.1} parent=11 // pred_fallthru
          _
        // Predicated region
        $region33: #{tpu_custom_call.1} parent=11 // pred_check
          %p267 = pneg %p209
        $region34: #{tpu_custom_call.1} parent=11 // pred_check_branch
          %269 = sbr.rel (%p267) target = $region36
        $region35: #{tpu_custom_call.1} parent=11 // pred_region
          _
        $region36: #{tpu_custom_call.1} parent=11 // pred_fallthru
          _
      $region12: #{tpu_custom_call.1} parent=5 // pred_fallthru
        _
      %p270 = scmp.lt.s32.totalorder %s17, 2
      // Predicated region
      $region37: #{tpu_custom_call.1} parent=5 // pred_check
        %p271 = pneg %p270
      $region38: #{tpu_custom_call.1} parent=5 // pred_check_branch
        %273 = sbr.rel (%p271) target = $region40
      $region39: #{tpu_custom_call.1} parent=5 // pred_region
        // Predicated region
        $region41: #{tpu_custom_call.1} parent=39 // pred_check
          %p274 = pneg %p51
        $region42: #{tpu_custom_call.1} parent=39 // pred_check_branch
          %276 = sbr.rel (%p274) target = $region44
        $region43: #{tpu_custom_call.1} parent=39 // pred_region
          %p277 = scmp.lt.s32.totalorder %s24, 1
          %s278 = scalar_select %p277, %s24, 1
          %p279 = scmp.lt.s32.totalorder %s25, 0
          %s280 = scalar_select %p279, %s25, 0
          %s281 = sadd.s32 %s280, %s278
          %s282 = smul.addr %s281, 8
          %s283 = scalar_lea.vmem %s0, %s282
        $region44: #{tpu_custom_call.1} parent=39 // pred_fallthru
          _
        // Predicated region
        $region45: #{tpu_custom_call.1} parent=39 // pred_check
          %p284 = pneg %p77
        $region46: #{tpu_custom_call.1} parent=39 // pred_check_branch
          %286 = sbr.rel (%p284) target = $region48
        $region47: #{tpu_custom_call.1} parent=39 // pred_region
          %p287 = scmp.lt.s32.totalorder %s24, 1
          %s288 = scalar_select %p287, %s24, 1
          %s289 = scalar_lea.vmem %s1, %s288
        $region48: #{tpu_custom_call.1} parent=39 // pred_fallthru
          _
      $region40: #{tpu_custom_call.1} parent=5 // pred_fallthru
        _
      %p290 = scmp.le.s32.totalorder 1, %s17
      %p291 = scmp.lt.s32.totalorder %s17, 3
      %p292 = pnand %p290, %p291
      %p293 = pneg %p292
      // Predicated region
      $region49: #{tpu_custom_call.1} parent=5 // pred_check
        _
      $region50: #{tpu_custom_call.1} parent=5 // pred_check_branch
        %295 = sbr.rel (%p292) target = $region52
      $region51: #{tpu_custom_call.1} parent=5 // pred_region
        %s296 = ssub.s32 %s17, 1
        %p297 = scmp.lt.s32.totalorder %s26, 1
        %s298 = scalar_select %p297, %s26, 1
        %p299 = scmp.lt.s32.totalorder %s27, 0
        %s300 = scalar_select %p299, %s27, 0
        %s301 = sadd.s32 %s300, %s298
        %s302 = smul.addr %s301, 8
        %s303 = scalar_lea.vmem %s0, %s302
        %p304 = pneg %p57
        %p305 = pneg %p54
        %p306 = scmp.lt.s32.totalorder %s26, 1
        %s307 = scalar_select %p306, %s26, 1
        %s308 = scalar_lea.vmem %s1, %s307
        %p309 = pneg %p83
        %p310 = pneg %p80
        %p311 = pneg %p104
        %p312 = pneg %p101
        %p313 = pneg %p125
        %p314 = pneg %p122
        %p315 = pneg %p146
        %p316 = pneg %p143
        %p317 = pneg %p167
        %p318 = pneg %p164
        %p319 = pneg %p188
        %p320 = pneg %p185
        %p321 = pneg %p209
        %p322 = pneg %p206
        %p323 = pneg %p237
        %p324 = pneg %p234
        %s325 = sand.u32 %s224, 1
        %s326 = scalar_lea.sflag [#allocation3], %s325
        %s327 = sand.u32 %s224, 1
        %s328 = scalar_lea.vmem [#allocation2], %s327
        %p329 = scmp.lt.s32.totalorder %s26, 1
        %s330 = scalar_select %p329, %s26, 1
        %p331 = scmp.lt.s32.totalorder %s27, 0
        %s332 = scalar_select %p331, %s27, 0
        %s333 = sadd.s32 %s332, %s330
        %s334 = smul.addr %s333, 8
        %s335 = scalar_lea.vmem %s0, %s334
        %p336 = scmp.lt.s32.totalorder %s26, 1
        %s337 = scalar_select %p336, %s26, 1
        %s338 = scalar_lea.vmem %s1, %s337
        %v339 = vld [vmem:[%s2] sm:$0xff]
        %v340 = vld [vmem:[%s2 + $0x8] sm:$0xff]
        %v341 = vld [vmem:[%s3] sm:$0xff]
        %v342 = vld [vmem:[%s3 + $0x8] sm:$0xff]
        %v343 = vld [vmem:[%s4] sm:$0xff]
        %v344 = vld [vmem:[%s4 + $0x8] sm:$0xff]
        %v345 = vld [vmem:[%s5] sm:$0xff]
        %v346 = vld [vmem:[%s5 + $0x8] sm:$0xff]
        %v347 = vld [vmem:[%s6] sm:$0xff]
        %v348 = vld [vmem:[%s6 + $0x8] sm:$0xff]
        %v349 = vld [vmem:[%s6 + $0x10] sm:$0xff]
        %v350 = vld [vmem:[%s6 + $0x18] sm:$0xff]
        %v351 = vld [vmem:[%s7] sm:$0xff]
        %v352 = vld [vmem:[%s7 + $0x8] sm:$0xff]
        %v353 = vld [vmem:[%s7 + $0x10] sm:$0xff]
        %v354 = vld [vmem:[%s7 + $0x18] sm:$0xff]
        %v355 = vld [vmem:[%s335] sm:$0xff]
        %v356 = vld [vmem:[%s338] sm:$0x1]
        %v357 = vmul.f32 %v355, %v355
        %vm358 = vcmask 64512
        %v360 = vsel %vm358, 1.0, 0
        %362 = vmatprep.subr.mxu0 0.0
        %363 = vmatpush1.msra.mxu0 0.0
        %364 = vmatprep.subr.mxu0 0.0
        %365 = vmatpush1.msra.mxu0 0.0
        %366 = vmatprep.subr.mxu0 0.0
        %367 = vmatpush1.msra.mxu0 0.0
        %368 = vmatprep.subr.mxu0 0.0
        %369 = vmatpush1.msra.mxu0 0.0
        %370 = vmatprep.subr.mxu0 0.0
        %371 = vmatpush1.msra.mxu0 0.0
        %372 = vmatprep.subr.mxu0 0.0
        %373 = vmatpush1.msra.mxu0 0.0
        %374 = vmatprep.subr.mxu0 0.0
        %375 = vmatpush1.msra.mxu0 0.0
        %376 = vmatprep.subr.mxu0 0.0
        %377 = vmatpush1.msra.mxu0 0.0
        %378 = vmatprep.subr.mxu0 0.0
        %379 = vmatpush1.msra.mxu0 0.0
        %380 = vmatprep.subr.mxu0 0.0
        %381 = vmatpush1.msra.mxu0 0.0
        %382 = vmatprep.subr.mxu0 0.0
        %383 = vmatpush1.msra.mxu0 0.0
        %384 = vmatprep.subr.mxu0 0.0
        %385 = vmatpush1.msra.mxu0 0.0
        %386 = vmatprep.subr.mxu0 0.0
        %387 = vmatpush1.msra.mxu0 0.0
        %388 = vmatprep.subr.mxu0 0.0
        %389 = vmatpush1.msra.mxu0 0.0
        %390 = vmatprep.subr.mxu0 0.0
        %391 = vmatpush1.msra.mxu0 0.0
        %392 = vmatprep.subr.mxu0 0.0
        %393 = vmatpush1.msra.mxu0 %v357
        %394 = vmatprep.subr.mxu0 0.0
        %395 = vmatpush2.msra.mxu0 0.0
        %396 = vmatprep.subr.mxu0 0.0
        %397 = vmatpush2.msra.mxu0 0.0
        %398 = vmatprep.subr.mxu0 0.0
        %399 = vmatpush2.msra.mxu0 0.0
        %400 = vmatprep.subr.mxu0 0.0
        %401 = vmatpush2.msra.mxu0 0.0
        %402 = vmatprep.subr.mxu0 0.0
        %403 = vmatpush2.msra.mxu0 0.0
        %404 = vmatprep.subr.mxu0 0.0
        %405 = vmatpush2.msra.mxu0 0.0
        %406 = vmatprep.subr.mxu0 0.0
        %407 = vmatpush2.msra.mxu0 0.0
        %408 = vmatprep.subr.mxu0 0.0
        %409 = vmatpush2.msra.mxu0 0.0
        %410 = vmatprep.subr.mxu0 0.0
        %411 = vmatpush2.msra.mxu0 0.0
        %412 = vmatprep.subr.mxu0 0.0
        %413 = vmatpush2.msra.mxu0 0.0
        %414 = vmatprep.subr.mxu0 0.0
        %415 = vmatpush2.msra.mxu0 0.0
        %416 = vmatprep.subr.mxu0 0.0
        %417 = vmatpush2.msra.mxu0 0.0
        %418 = vmatprep.subr.mxu0 0.0
        %419 = vmatpush2.msra.mxu0 0.0
        %420 = vmatprep.subr.mxu0 0.0
        %421 = vmatpush2.msra.mxu0 0.0
        %422 = vmatprep.subr.mxu0 0.0
        %423 = vmatpush2.msra.mxu0 0.0
        %424 = vmatprep.subr.mxu0 0.0
        %425 = vmatpush2.msra.mxu0 0.0
        %426 = vmatprep.mubr.f32.mxu0 0.0
        %427 = vmatmul.mubr.f32.gmra.mxu0 %v360
        %v428 = vpop.f32.mrf.mxu0
        %v429 = vadd.f32 0.0, %v428
        %v430 = vpop.f32.mrf.mxu0
        %431 = vdwg.mxu0
        %v432 = vmul.f32 %v429, 0.5
        %v433 = vsub.f32 -7.351508, %v432
        %435 = vset.pattern.permute.xlu0 0
        %436 = vperm.xlu0 %435, %v341
        %v437 = vpop.permute.xlu0 %436
        %440 = vset.pattern.permute.xlu0 0
        %441 = vperm.xlu0 %440, %v342
        %v442 = vpop.permute.xlu0 %441
        %v445 = vsel %vm358, %v339, 0
        %v448 = vsel %vm358, %v340, 0
        %450 = vmatprep.subr.mxu0 0.0
        %451 = vmatpush1.msra.mxu0 0.0
        %452 = vmatprep.subr.mxu0 0.0
        %453 = vmatpush1.msra.mxu0 0.0
        %454 = vmatprep.subr.mxu0 0.0
        %455 = vmatpush1.msra.mxu0 0.0
        %456 = vmatprep.subr.mxu0 0.0
        %457 = vmatpush1.msra.mxu0 0.0
        %458 = vmatprep.subr.mxu0 0.0
        %459 = vmatpush1.msra.mxu0 0.0
        %460 = vmatprep.subr.mxu0 0.0
        %461 = vmatpush1.msra.mxu0 0.0
        %462 = vmatprep.subr.mxu0 0.0
        %463 = vmatpush1.msra.mxu0 0.0
        %464 = vmatprep.subr.mxu0 0.0
        %465 = vmatpush1.msra.mxu0 0.0
        %466 = vmatprep.subr.mxu0 0.0
        %467 = vmatpush1.msra.mxu0 0.0
        %468 = vmatprep.subr.mxu0 0.0
        %469 = vmatpush1.msra.mxu0 0.0
        %470 = vmatprep.subr.mxu0 0.0
        %471 = vmatpush1.msra.mxu0 0.0
        %472 = vmatprep.subr.mxu0 0.0
        %473 = vmatpush1.msra.mxu0 0.0
        %474 = vmatprep.subr.mxu0 0.0
        %475 = vmatpush1.msra.mxu0 0.0
        %476 = vmatprep.subr.mxu0 0.0
        %477 = vmatpush1.msra.mxu0 0.0
        %478 = vmatprep.subr.mxu0 0.0
        %479 = vmatpush1.msra.mxu0 0.0
        %480 = vmatprep.subr.mxu0 0.0
        %481 = vmatpush1.msra.mxu0 %v355
        %482 = vmatprep.subr.mxu0 0.0
        %483 = vmatpush2.msra.mxu0 0.0
        %484 = vmatprep.subr.mxu0 0.0
        %485 = vmatpush2.msra.mxu0 0.0
        %486 = vmatprep.subr.mxu0 0.0
        %487 = vmatpush2.msra.mxu0 0.0
        %488 = vmatprep.subr.mxu0 0.0
        %489 = vmatpush2.msra.mxu0 0.0
        %490 = vmatprep.subr.mxu0 0.0
        %491 = vmatpush2.msra.mxu0 0.0
        %492 = vmatprep.subr.mxu0 0.0
        %493 = vmatpush2.msra.mxu0 0.0
        %494 = vmatprep.subr.mxu0 0.0
        %495 = vmatpush2.msra.mxu0 0.0
        %496 = vmatprep.subr.mxu0 0.0
        %497 = vmatpush2.msra.mxu0 0.0
        %498 = vmatprep.subr.mxu0 0.0
        %499 = vmatpush2.msra.mxu0 0.0
        %500 = vmatprep.subr.mxu0 0.0
        %501 = vmatpush2.msra.mxu0 0.0
        %502 = vmatprep.subr.mxu0 0.0
        %503 = vmatpush2.msra.mxu0 0.0
        %504 = vmatprep.subr.mxu0 0.0
        %505 = vmatpush2.msra.mxu0 0.0
        %506 = vmatprep.subr.mxu0 0.0
        %507 = vmatpush2.msra.mxu0 0.0
        %508 = vmatprep.subr.mxu0 0.0
        %509 = vmatpush2.msra.mxu0 0.0
        %510 = vmatprep.subr.mxu0 0.0
        %511 = vmatpush2.msra.mxu0 0.0
        %512 = vmatprep.subr.mxu0 0.0
        %513 = vmatpush2.msra.mxu0 0.0
        %514 = vmatprep.mubr.f32.mxu0 0.0
        %515 = vmatmul.mubr.f32.gmra.mxu0 %v445
        %v516 = vpop.f32.mrf.mxu0
        %v517 = vadd.f32 %v437, %v516
        %v518 = vpop.f32.mrf.mxu0
        %519 = vmatprep.mubr.f32.mxu0 0.0
        %520 = vmatmul.mubr.f32.gmra.mxu0 %v448
        %v521 = vpop.f32.mrf.mxu0
        %v522 = vadd.f32 %v442, %v521
        %v523 = vpop.f32.mrf.mxu0
        %524 = vdwg.mxu0
        %v525 = vmax.f32 %v517, 0.0
        %v526 = vmax.f32 %v522, 0.0
        %528 = vset.pattern.permute.xlu0 0
        %529 = vperm.xlu0 %528, %v345
        %v530 = vpop.permute.xlu0 %529
        %533 = vset.pattern.permute.xlu0 0
        %534 = vperm.xlu0 %533, %v346
        %v535 = vpop.permute.xlu0 %534
        %vm537 = vcmask 130048
        %v539 = vsel %vm537, %v343, 0
        %v542 = vsel %vm537, %v344, 0
        %544 = vmatprep.subr.mxu0 0.0
        %545 = vmatpush1.msra.mxu0 0.0
        %546 = vmatprep.subr.mxu0 0.0
        %547 = vmatpush1.msra.mxu0 0.0
        %548 = vmatprep.subr.mxu0 0.0
        %549 = vmatpush1.msra.mxu0 0.0
        %550 = vmatprep.subr.mxu0 0.0
        %551 = vmatpush1.msra.mxu0 0.0
        %552 = vmatprep.subr.mxu0 0.0
        %553 = vmatpush1.msra.mxu0 0.0
        %554 = vmatprep.subr.mxu0 0.0
        %555 = vmatpush1.msra.mxu0 0.0
        %556 = vmatprep.subr.mxu0 0.0
        %557 = vmatpush1.msra.mxu0 0.0
        %558 = vmatprep.subr.mxu0 0.0
        %559 = vmatpush1.msra.mxu0 0.0
        %560 = vmatprep.subr.mxu0 0.0
        %561 = vmatpush1.msra.mxu0 0.0
        %562 = vmatprep.subr.mxu0 0.0
        %563 = vmatpush1.msra.mxu0 0.0
        %564 = vmatprep.subr.mxu0 0.0
        %565 = vmatpush1.msra.mxu0 0.0
        %566 = vmatprep.subr.mxu0 0.0
        %567 = vmatpush1.msra.mxu0 0.0
        %568 = vmatprep.subr.mxu0 0.0
        %569 = vmatpush1.msra.mxu0 0.0
        %570 = vmatprep.subr.mxu0 0.0
        %571 = vmatpush1.msra.mxu0 0.0
        %572 = vmatprep.subr.mxu0 0.0
        %573 = vmatpush1.msra.mxu0 %v526
        %574 = vmatprep.subr.mxu0 0.0
        %575 = vmatpush1.msra.mxu0 %v525
        %576 = vmatprep.subr.mxu0 0.0
        %577 = vmatpush2.msra.mxu0 0.0
        %578 = vmatprep.subr.mxu0 0.0
        %579 = vmatpush2.msra.mxu0 0.0
        %580 = vmatprep.subr.mxu0 0.0
        %581 = vmatpush2.msra.mxu0 0.0
        %582 = vmatprep.subr.mxu0 0.0
        %583 = vmatpush2.msra.mxu0 0.0
        %584 = vmatprep.subr.mxu0 0.0
        %585 = vmatpush2.msra.mxu0 0.0
        %586 = vmatprep.subr.mxu0 0.0
        %587 = vmatpush2.msra.mxu0 0.0
        %588 = vmatprep.subr.mxu0 0.0
        %589 = vmatpush2.msra.mxu0 0.0
        %590 = vmatprep.subr.mxu0 0.0
        %591 = vmatpush2.msra.mxu0 0.0
        %592 = vmatprep.subr.mxu0 0.0
        %593 = vmatpush2.msra.mxu0 0.0
        %594 = vmatprep.subr.mxu0 0.0
        %595 = vmatpush2.msra.mxu0 0.0
        %596 = vmatprep.subr.mxu0 0.0
        %597 = vmatpush2.msra.mxu0 0.0
        %598 = vmatprep.subr.mxu0 0.0
        %599 = vmatpush2.msra.mxu0 0.0
        %600 = vmatprep.subr.mxu0 0.0
        %601 = vmatpush2.msra.mxu0 0.0
        %602 = vmatprep.subr.mxu0 0.0
        %603 = vmatpush2.msra.mxu0 0.0
        %604 = vmatprep.subr.mxu0 0.0
        %605 = vmatpush2.msra.mxu0 0.0
        %606 = vmatprep.subr.mxu0 0.0
        %607 = vmatpush2.msra.mxu0 0.0
        %608 = vmatprep.mubr.f32.mxu0 0.0
        %609 = vmatmul.mubr.f32.gmra.mxu0 %v539
        %v610 = vpop.f32.mrf.mxu0
        %v611 = vadd.f32 %v530, %v610
        %v612 = vpop.f32.mrf.mxu0
        %613 = vmatprep.mubr.f32.mxu0 0.0
        %614 = vmatmul.mubr.f32.gmra.mxu0 %v542
        %v615 = vpop.f32.mrf.mxu0
        %v616 = vadd.f32 %v535, %v615
        %v617 = vpop.f32.mrf.mxu0
        %618 = vdwg.mxu0
        %v619 = vmax.f32 %v611, 0.0
        %v620 = vmax.f32 %v616, 0.0
        %622 = vset.pattern.permute.xlu0 0
        %623 = vperm.xlu0 %622, %v351
        %v624 = vpop.permute.xlu0 %623
        %627 = vset.pattern.permute.xlu0 0
        %628 = vperm.xlu0 %627, %v352
        %v629 = vpop.permute.xlu0 %628
        %632 = vset.pattern.permute.xlu0 0
        %633 = vperm.xlu0 %632, %v353
        %v634 = vpop.permute.xlu0 %633
        %637 = vset.pattern.permute.xlu0 0
        %638 = vperm.xlu0 %637, %v354
        %v639 = vpop.permute.xlu0 %638
        %v642 = vsel %vm537, %v347, 0
        %v645 = vsel %vm537, %v348, 0
        %v648 = vsel %vm537, %v349, 0
        %v651 = vsel %vm537, %v350, 0
        %653 = vmatprep.subr.mxu0 0.0
        %654 = vmatpush1.msra.mxu0 0.0
        %655 = vmatprep.subr.mxu0 0.0
        %656 = vmatpush1.msra.mxu0 0.0
        %657 = vmatprep.subr.mxu0 0.0
        %658 = vmatpush1.msra.mxu0 0.0
        %659 = vmatprep.subr.mxu0 0.0
        %660 = vmatpush1.msra.mxu0 0.0
        %661 = vmatprep.subr.mxu0 0.0
        %662 = vmatpush1.msra.mxu0 0.0
        %663 = vmatprep.subr.mxu0 0.0
        %664 = vmatpush1.msra.mxu0 0.0
        %665 = vmatprep.subr.mxu0 0.0
        %666 = vmatpush1.msra.mxu0 0.0
        %667 = vmatprep.subr.mxu0 0.0
        %668 = vmatpush1.msra.mxu0 0.0
        %669 = vmatprep.subr.mxu0 0.0
        %670 = vmatpush1.msra.mxu0 0.0
        %671 = vmatprep.subr.mxu0 0.0
        %672 = vmatpush1.msra.mxu0 0.0
        %673 = vmatprep.subr.mxu0 0.0
        %674 = vmatpush1.msra.mxu0 0.0
        %675 = vmatprep.subr.mxu0 0.0
        %676 = vmatpush1.msra.mxu0 0.0
        %677 = vmatprep.subr.mxu0 0.0
        %678 = vmatpush1.msra.mxu0 0.0
        %679 = vmatprep.subr.mxu0 0.0
        %680 = vmatpush1.msra.mxu0 0.0
        %681 = vmatprep.subr.mxu0 0.0
        %682 = vmatpush1.msra.mxu0 %v620
        %683 = vmatprep.subr.mxu0 0.0
        %684 = vmatpush1.msra.mxu0 %v619
        %685 = vmatprep.subr.mxu0 0.0
        %686 = vmatpush2.msra.mxu0 0.0
        %687 = vmatprep.subr.mxu0 0.0
        %688 = vmatpush2.msra.mxu0 0.0
        %689 = vmatprep.subr.mxu0 0.0
        %690 = vmatpush2.msra.mxu0 0.0
        %691 = vmatprep.subr.mxu0 0.0
        %692 = vmatpush2.msra.mxu0 0.0
        %693 = vmatprep.subr.mxu0 0.0
        %694 = vmatpush2.msra.mxu0 0.0
        %695 = vmatprep.subr.mxu0 0.0
        %696 = vmatpush2.msra.mxu0 0.0
        %697 = vmatprep.subr.mxu0 0.0
        %698 = vmatpush2.msra.mxu0 0.0
        %699 = vmatprep.subr.mxu0 0.0
        %700 = vmatpush2.msra.mxu0 0.0
        %701 = vmatprep.subr.mxu0 0.0
        %702 = vmatpush2.msra.mxu0 0.0
        %703 = vmatprep.subr.mxu0 0.0
        %704 = vmatpush2.msra.mxu0 0.0
        %705 = vmatprep.subr.mxu0 0.0
        %706 = vmatpush2.msra.mxu0 0.0
        %707 = vmatprep.subr.mxu0 0.0
        %708 = vmatpush2.msra.mxu0 0.0
        %709 = vmatprep.subr.mxu0 0.0
        %710 = vmatpush2.msra.mxu0 0.0
        %711 = vmatprep.subr.mxu0 0.0
        %712 = vmatpush2.msra.mxu0 0.0
        %713 = vmatprep.subr.mxu0 0.0
        %714 = vmatpush2.msra.mxu0 0.0
        %715 = vmatprep.subr.mxu0 0.0
        %716 = vmatpush2.msra.mxu0 0.0
        %717 = vmatprep.mubr.f32.mxu0 0.0
        %718 = vmatmul.mubr.f32.gmra.mxu0 %v642
        %v719 = vpop.f32.mrf.mxu0
        %v720 = vadd.f32 %v624, %v719
        %v721 = vpop.f32.mrf.mxu0
        %722 = vmatprep.mubr.f32.mxu0 0.0
        %723 = vmatmul.mubr.f32.gmra.mxu0 %v645
        %v724 = vpop.f32.mrf.mxu0
        %v725 = vadd.f32 %v629, %v724
        %v726 = vpop.f32.mrf.mxu0
        %727 = vmatprep.mubr.f32.mxu0 0.0
        %728 = vmatmul.mubr.f32.gmra.mxu0 %v648
        %v729 = vpop.f32.mrf.mxu0
        %v730 = vadd.f32 %v634, %v729
        %v731 = vpop.f32.mrf.mxu0
        %732 = vmatprep.mubr.f32.mxu0 0.0
        %733 = vmatmul.mubr.f32.gmra.mxu0 %v651
        %v734 = vpop.f32.mrf.mxu0
        %v735 = vadd.f32 %v639, %v734
        %v736 = vpop.f32.mrf.mxu0
        %737 = vdwg.mxu0
        %v738 = vmax.f32 %v720, 0.0
        %v739 = vmax.f32 %v725, 0.0
        %v740 = vmax.f32 %v730, 0.0
        %v741 = vmax.f32 %v735, 0.0
        %v742 = vand.u32 2147483647, %v720
        %v743 = vand.u32 2147483647, %v725
        %v744 = vand.u32 2147483647, %v730
        %v745 = vand.u32 2147483647, %v735
        %v746 = vsub.f32 0.0, %v742
        %v747 = vsub.f32 0.0, %v743
        %v748 = vsub.f32 0.0, %v744
        %v749 = vsub.f32 0.0, %v745
        %v750 = vmul.f32 %v746, 1.442695
        %v751 = vpow.pop %v750
        %v752 = vmul.f32 %v747, 1.442695
        %v753 = vpow.pop %v752
        %v754 = vmul.f32 %v748, 1.442695
        %v755 = vpow.pop %v754
        %v756 = vmul.f32 %v749, 1.442695
        %v757 = vpow.pop %v756
        %v758 = vadd.f32 %v751, 1.0
        %v759 = vlog2.pop %v758
        %v760 = vmul.f32 %v759, 0.6931472
        %v761 = vmul.f32 -0.5, %v751
        %v762 = vadd.f32 %v761, 1.0
        %v763 = vmul.f32 %v762, %v751
        %v764 = vand.u32 2147483647, %v751
        %vm765 = vcmp.lt.f32.partialorder %v764, 0.0004427343
        %v766 = vsel %vm765, %v763, %v760
        %v767 = vadd.f32 %v753, 1.0
        %v768 = vlog2.pop %v767
        %v769 = vmul.f32 %v768, 0.6931472
        %v770 = vmul.f32 -0.5, %v753
        %v771 = vadd.f32 %v770, 1.0
        %v772 = vmul.f32 %v771, %v753
        %v773 = vand.u32 2147483647, %v753
        %vm774 = vcmp.lt.f32.partialorder %v773, 0.0004427343
        %v775 = vsel %vm774, %v772, %v769
        %v776 = vadd.f32 %v755, 1.0
        %v777 = vlog2.pop %v776
        %v778 = vmul.f32 %v777, 0.6931472
        %v779 = vmul.f32 -0.5, %v755
        %v780 = vadd.f32 %v779, 1.0
        %v781 = vmul.f32 %v780, %v755
        %v782 = vand.u32 2147483647, %v755
        %vm783 = vcmp.lt.f32.partialorder %v782, 0.0004427343
        %v784 = vsel %vm783, %v781, %v778
        %v785 = vadd.f32 %v757, 1.0
        %v786 = vlog2.pop %v785
        %v787 = vmul.f32 %v786, 0.6931472
        %v788 = vmul.f32 -0.5, %v757
        %v789 = vadd.f32 %v788, 1.0
        %v790 = vmul.f32 %v789, %v757
        %v791 = vand.u32 2147483647, %v757
        %vm792 = vcmp.lt.f32.partialorder %v791, 0.0004427343
        %v793 = vsel %vm792, %v790, %v787
        %v794 = vadd.f32 %v738, %v766
        %v795 = vadd.f32 %v739, %v775
        %v796 = vadd.f32 %v740, %v784
        %v797 = vadd.f32 %v741, %v793
        %vm798 = vcmask 261120
        %v800 = vsel %vm798, %v356, 0
        %802 = vmatprep.subr.mxu0 0.0
        %803 = vmatpush1.msra.mxu0 0.0
        %804 = vmatprep.subr.mxu0 0.0
        %805 = vmatpush1.msra.mxu0 0.0
        %806 = vmatprep.subr.mxu0 0.0
        %807 = vmatpush1.msra.mxu0 0.0
        %808 = vmatprep.subr.mxu0 0.0
        %809 = vmatpush1.msra.mxu0 0.0
        %810 = vmatprep.subr.mxu0 0.0
        %811 = vmatpush1.msra.mxu0 0.0
        %812 = vmatprep.subr.mxu0 0.0
        %813 = vmatpush1.msra.mxu0 0.0
        %814 = vmatprep.subr.mxu0 0.0
        %815 = vmatpush1.msra.mxu0 0.0
        %816 = vmatprep.subr.mxu0 0.0
        %817 = vmatpush1.msra.mxu0 0.0
        %818 = vmatprep.subr.mxu0 0.0
        %819 = vmatpush1.msra.mxu0 0.0
        %820 = vmatprep.subr.mxu0 0.0
        %821 = vmatpush1.msra.mxu0 0.0
        %822 = vmatprep.subr.mxu0 0.0
        %823 = vmatpush1.msra.mxu0 0.0
        %824 = vmatprep.subr.mxu0 0.0
        %825 = vmatpush1.msra.mxu0 0.0
        %826 = vmatprep.subr.mxu0 0.0
        %827 = vmatpush1.msra.mxu0 %v735
        %828 = vmatprep.subr.mxu0 0.0
        %829 = vmatpush1.msra.mxu0 %v730
        %830 = vmatprep.subr.mxu0 0.0
        %831 = vmatpush1.msra.mxu0 %v725
        %832 = vmatprep.subr.mxu0 0.0
        %833 = vmatpush1.msra.mxu0 %v720
        %834 = vmatprep.subr.mxu0 0.0
        %835 = vmatpush2.msra.mxu0 0.0
        %836 = vmatprep.subr.mxu0 0.0
        %837 = vmatpush2.msra.mxu0 0.0
        %838 = vmatprep.subr.mxu0 0.0
        %839 = vmatpush2.msra.mxu0 0.0
        %840 = vmatprep.subr.mxu0 0.0
        %841 = vmatpush2.msra.mxu0 0.0
        %842 = vmatprep.subr.mxu0 0.0
        %843 = vmatpush2.msra.mxu0 0.0
        %844 = vmatprep.subr.mxu0 0.0
        %845 = vmatpush2.msra.mxu0 0.0
        %846 = vmatprep.subr.mxu0 0.0
        %847 = vmatpush2.msra.mxu0 0.0
        %848 = vmatprep.subr.mxu0 0.0
        %849 = vmatpush2.msra.mxu0 0.0
        %850 = vmatprep.subr.mxu0 0.0
        %851 = vmatpush2.msra.mxu0 0.0
        %852 = vmatprep.subr.mxu0 0.0
        %853 = vmatpush2.msra.mxu0 0.0
        %854 = vmatprep.subr.mxu0 0.0
        %855 = vmatpush2.msra.mxu0 0.0
        %856 = vmatprep.subr.mxu0 0.0
        %857 = vmatpush2.msra.mxu0 0.0
        %858 = vmatprep.subr.mxu0 0.0
        %859 = vmatpush2.msra.mxu0 0.0
        %860 = vmatprep.subr.mxu0 0.0
        %861 = vmatpush2.msra.mxu0 0.0
        %862 = vmatprep.subr.mxu0 0.0
        %863 = vmatpush2.msra.mxu0 0.0
        %864 = vmatprep.subr.mxu0 0.0
        %865 = vmatpush2.msra.mxu0 0.0
        %866 = vmatprep.mubr.f32.mxu0 0.0
        %867 = vmatmul.mubr.f32.gmra.mxu0 %v800
        %v868 = vpop.f32.mrf.mxu0
        %v869 = vadd.f32 0.0, %v868
        %v870 = vpop.f32.mrf.mxu0
        %871 = vdwg.mxu0
        %v872 = vsel %vm798, 1.0, 0
        %874 = vmatprep.subr.mxu0 0.0
        %875 = vmatpush1.msra.mxu0 0.0
        %876 = vmatprep.subr.mxu0 0.0
        %877 = vmatpush1.msra.mxu0 0.0
        %878 = vmatprep.subr.mxu0 0.0
        %879 = vmatpush1.msra.mxu0 0.0
        %880 = vmatprep.subr.mxu0 0.0
        %881 = vmatpush1.msra.mxu0 0.0
        %882 = vmatprep.subr.mxu0 0.0
        %883 = vmatpush1.msra.mxu0 0.0
        %884 = vmatprep.subr.mxu0 0.0
        %885 = vmatpush1.msra.mxu0 0.0
        %886 = vmatprep.subr.mxu0 0.0
        %887 = vmatpush1.msra.mxu0 0.0
        %888 = vmatprep.subr.mxu0 0.0
        %889 = vmatpush1.msra.mxu0 0.0
        %890 = vmatprep.subr.mxu0 0.0
        %891 = vmatpush1.msra.mxu0 0.0
        %892 = vmatprep.subr.mxu0 0.0
        %893 = vmatpush1.msra.mxu0 0.0
        %894 = vmatprep.subr.mxu0 0.0
        %895 = vmatpush1.msra.mxu0 0.0
        %896 = vmatprep.subr.mxu0 0.0
        %897 = vmatpush1.msra.mxu0 0.0
        %898 = vmatprep.subr.mxu0 0.0
        %899 = vmatpush1.msra.mxu0 %v797
        %900 = vmatprep.subr.mxu0 0.0
        %901 = vmatpush1.msra.mxu0 %v796
        %902 = vmatprep.subr.mxu0 0.0
        %903 = vmatpush1.msra.mxu0 %v795
        %904 = vmatprep.subr.mxu0 0.0
        %905 = vmatpush1.msra.mxu0 %v794
        %906 = vmatprep.subr.mxu0 0.0
        %907 = vmatpush2.msra.mxu0 0.0
        %908 = vmatprep.subr.mxu0 0.0
        %909 = vmatpush2.msra.mxu0 0.0
        %910 = vmatprep.subr.mxu0 0.0
        %911 = vmatpush2.msra.mxu0 0.0
        %912 = vmatprep.subr.mxu0 0.0
        %913 = vmatpush2.msra.mxu0 0.0
        %914 = vmatprep.subr.mxu0 0.0
        %915 = vmatpush2.msra.mxu0 0.0
        %916 = vmatprep.subr.mxu0 0.0
        %917 = vmatpush2.msra.mxu0 0.0
        %918 = vmatprep.subr.mxu0 0.0
        %919 = vmatpush2.msra.mxu0 0.0
        %920 = vmatprep.subr.mxu0 0.0
        %921 = vmatpush2.msra.mxu0 0.0
        %922 = vmatprep.subr.mxu0 0.0
        %923 = vmatpush2.msra.mxu0 0.0
        %924 = vmatprep.subr.mxu0 0.0
        %925 = vmatpush2.msra.mxu0 0.0
        %926 = vmatprep.subr.mxu0 0.0
        %927 = vmatpush2.msra.mxu0 0.0
        %928 = vmatprep.subr.mxu0 0.0
        %929 = vmatpush2.msra.mxu0 0.0
        %930 = vmatprep.subr.mxu0 0.0
        %931 = vmatpush2.msra.mxu0 0.0
        %932 = vmatprep.subr.mxu0 0.0
        %933 = vmatpush2.msra.mxu0 0.0
        %934 = vmatprep.subr.mxu0 0.0
        %935 = vmatpush2.msra.mxu0 0.0
        %936 = vmatprep.subr.mxu0 0.0
        %937 = vmatpush2.msra.mxu0 0.0
        %938 = vmatprep.mubr.f32.mxu0 0.0
        %939 = vmatmul.mubr.f32.gmra.mxu0 %v872
        %v940 = vpop.f32.mrf.mxu0
        %v941 = vadd.f32 0.0, %v940
        %v942 = vpop.f32.mrf.mxu0
        %943 = vdwg.mxu0
        %v944 = vadd.f32 %v433, %v869
        %v945 = vsub.f32 %v944, %v941
        %vm946 = vcmask 24576
        %947 = vst.msk [vmem:[%s328] sm:$0x1] %vm946, %v945
        %s948 = sand.u32 %s224, 1
        %s949 = scalar_lea.sflag [#allocation3], %s948
        %s950 = sand.u32 %s224, 1
        %s951 = scalar_lea.vmem [#allocation2], %s950
        // Predicated region
        $region53: #{tpu_custom_call.1} parent=51 // pred_check
          %p952 = pneg %p234
        $region54: #{tpu_custom_call.1} parent=51 // pred_check_branch
          %954 = sbr.rel (%p952) target = $region56
        $region55: #{tpu_custom_call.1} parent=51 // pred_region
          %s956 = ssub.s32 16, 16
          %957 = vsyncadd %s949, %s956
          %s958 = sadd.s32 %s27, %s26
          %s959 = smul.addr %s958, 16
          %s960 = scalar_lea.hbm %s8, %s959
          %s962 = sshll.u32 %s951, 4
          %s963 = int_to_ptr.vmem [resolvable:$true] %s962
          %965 = dma.vmem_to_hbm [thread:$0]  %s963, 16, %s960, %s949
        $region56: #{tpu_custom_call.1} parent=51 // pred_fallthru
          _
      $region52: #{tpu_custom_call.1} parent=5 // pred_fallthru
        _
      %p966 = scmp.le.s32.totalorder 2, %s17
      // Predicated region
      $region57: #{tpu_custom_call.1} parent=5 // pred_check
        %p967 = pneg %p966
      $region58: #{tpu_custom_call.1} parent=5 // pred_check_branch
        %969 = sbr.rel (%p967) target = $region60
      $region59: #{tpu_custom_call.1} parent=5 // pred_region
        %s970 = ssub.s32 %s17, 2
        // Predicated region
        $region61: #{tpu_custom_call.1} parent=59 // pred_check
          %p971 = pneg %p240
        $region62: #{tpu_custom_call.1} parent=59 // pred_check_branch
          %973 = sbr.rel (%p971) target = $region64
        $region63: #{tpu_custom_call.1} parent=59 // pred_region
          %s974 = sand.u32 %s225, 1
          %s975 = scalar_lea.sflag [#allocation3], %s974
          %s976 = sand.u32 %s225, 1
          %s977 = scalar_lea.vmem [#allocation2], %s976
          %978 = dma.done %s975, 16
        $region64: #{tpu_custom_call.1} parent=59 // pred_fallthru
          _
      $region60: #{tpu_custom_call.1} parent=5 // pred_fallthru
        _
    $region6: #{tpu_custom_call.1} parent=1 // loop_footer
      %s21 = sadd.s32 1, %s17
    $region7: #{tpu_custom_call.1} parent=1 // loop_footer_branch
      %16 = sbr.rel target = $region3
    $region8: #{tpu_custom_call.1} parent=1 // loop_exit
      _
    %979 = vsyncpa [#allocation3], 1
    %s980 = scalar_lea.sflag [#allocation3], 1
    %981 = vsyncpa %s980, 1

</llo_original>
